<compile_context>
chip_gen: v6e
topology: v6e:2x2x1
jax: 0.10.0
libtpu: 0.0.40
codegen_flags: <defaults>
</compile_context>

<pallas_src>
import functools
import math

import jax
import jax.numpy as jnp
import numpy as np
from jax import lax
from jax.experimental import pallas as pl
from jax.experimental.pallas import tpu as pltpu


def _const_spec(shape, index_map):
    """BlockSpec for constant-index operands (weights / biases / LN params).

    Their index_map never changes across the grid, so double-buffering them is
    pure VMEM waste — request single buffering where the API supports it."""
    try:
        return pl.BlockSpec(shape, index_map, pipeline_mode=pl.Buffered(1))
    except Exception:   # pipeline_mode kwarg unavailable on this JAX version
        return pl.BlockSpec(shape, index_map)


def _vmem_limit_bytes():
    """Scoped-VMEM budget sized to the chip (v5e/v6e: 128 MiB, v7x: 64 MiB)."""
    try:
        cap = pltpu.get_tpu_info().vmem_capacity_bytes
    except Exception:
        cap = 128 * 1024 * 1024
    return int(min(100 * 1024 * 1024, int(cap * 0.8)))


# ----------------------------------------------------------------------------
# Kernel A: LayerNorm of both residual streams + fused QKV projections.
# ----------------------------------------------------------------------------
def _norm_qkv_kernel(x1_ref, x2_ref, g_ref, b_ref,
                     wq_ref, bq_ref, wk_ref, bk_ref, wv_ref, bv_ref,
                     q_ref, k_ref, v_ref,
                     *, eps: float, q_scale: float, mxu_dtype):
    """LayerNorm of both inputs + QKV projections over one (rows, D) tile."""
    gamma = g_ref[...]
    beta = b_ref[...]

    def layer_norm(x):                       # f32 element-wise (v5e-safe)
        x = x.astype(jnp.float32)
        mu = jnp.mean(x, axis=-1, keepdims=True)
        xc = x - mu
        var = jnp.mean(xc * xc, axis=-1, keepdims=True)
        return (xc * lax.rsqrt(var + eps)) * gamma + beta

    n1 = layer_norm(x1_ref[...]).astype(mxu_dtype)       # query path
    n2 = layer_norm(x2_ref[...]).astype(mxu_dtype)       # key/value path

    # Tall (rows, D) x (D, D) matmuls: bf16 MXU operands, f32 accumulation.
    q = jnp.dot(n1, wq_ref[...], preferred_element_type=jnp.float32) + bq_ref[...]
    k = jnp.dot(n2, wk_ref[...], preferred_element_type=jnp.float32) + bk_ref[...]
    v = jnp.dot(n2, wv_ref[...], preferred_element_type=jnp.float32) + bv_ref[...]

    q_ref[...] = (q * q_scale).astype(q_ref.dtype)       # fold 1/sqrt(hd) into Q
    k_ref[...] = k.astype(k_ref.dtype)
    v_ref[...] = v.astype(v_ref.dtype)
    # TODO(synk): for D >= ~2K add an output-column grid axis that streams
    #             (D, tn) weight slabs (v7x 64 MiB VMEM), with LN cached at n==0.


# ----------------------------------------------------------------------------
# Kernel B: per-batch multi-head attention + fused output projection.
# ----------------------------------------------------------------------------
def _attn_outproj_kernel(q_ref, k_ref, v_ref, wo_ref, bo_ref, res_ref, o_ref,
                         *, num_heads: int, mxu_dtype):
    """All heads of one batch element in a single grid step.

    Per-head attention with deferred softmax normalisation; head contexts are
    re-assembled into one (S, D) slab so the output projection is a single
    full-D-contraction MXU matmul, and residual + bias + projection is written
    to o_ref exactly once (f32 accumulation, lane-dense D-wide store).
    """
    q = q_ref[0]                                      # (S, D) bf16, pre-scaled
    k = k_ref[0]
    v = v_ref[0]
    S, D = q.shape
    hd = D // num_heads

    ctx_parts = []
    for h in range(num_heads):                        # static unroll over heads
        sl = slice(h * hd, (h + 1) * hd)
        q_h, k_h, v_h = q[:, sl], k[:, sl], v[:, sl]

        # Q_h @ K_h^T without materialising K^T: contract head_dim.
        scores = lax.dot_general(q_h, k_h, (((1,), (1,)), ((), ())),
                                 preferred_element_type=jnp.float32)   # (S, S)

        # Numerically stable softmax; normalisation deferred until after P @ V.
        m = jnp.max(scores, axis=-1, keepdims=True)
        p = jnp.exp(scores - m)                       # f32 (v5e-safe)
        denom = jnp.sum(p, axis=-1, keepdims=True)
        # TODO(synk): on v6e/v7x the exp could be done in bf16 for ~2x EUP
        #             throughput (keep max/sum in f32); left in f32 for v5e.

        ctx_h = jnp.dot(p.astype(mxu_dtype), v_h,
                        preferred_element_type=jnp.float32)            # (S, hd)
        ctx_h = ctx_h * pl.reciprocal(denom, approx=True)              # EUP
        ctx_parts.append(ctx_h.astype(mxu_dtype))

    ctx = jnp.concatenate(ctx_parts, axis=-1)         # (S, D), head-major order

    # Single full-D out-projection (full MXU pass depth) + residual + bias.
    proj = jnp.dot(ctx, wo_ref[...], preferred_element_type=jnp.float32)
    o_ref[0] = (res_ref[0].astype(jnp.float32) + bo_ref[...] + proj
                ).astype(o_ref.dtype)
    # TODO(synk): dropout (attention + sublayer) is an eval-mode identity here;
    #             training mode would use pltpu.prng_seed / prng_random_bits.
    # TODO(synk): for production sequence lengths add a query-tile grid axis and
    #             a kv grid axis with online-softmax running (m, l, acc) so the
    #             (S, S) scores tile stays bounded (needed for v7x 64 MiB VMEM).


# ----------------------------------------------------------------------------
# Wrapper
# ----------------------------------------------------------------------------
def sublayer_logic_forward(srb1, srb2, params, *, num_heads,
                           mxu_dtype=jnp.bfloat16, eps=1e-5):
    """srb1 + MHA(LayerNorm(srb1), LayerNorm(srb2), LayerNorm(srb2))."""
    B, S, D = srb1.shape
    assert D % num_heads == 0
    H, hd = num_heads, D // num_heads
    M = B * S
    f32 = jnp.float32

    # PyTorch Linear weights are (out, in); pre-transpose to (in, out) and cast
    # MXU operands to bf16 (trace-time glue / layout only).
    wq_t = params["wq"].T.astype(mxu_dtype)
    wk_t = params["wk"].T.astype(mxu_dtype)
    wv_t = params["wv"].T.astype(mxu_dtype)
    wo_t = params["wo"].T.astype(mxu_dtype)
    bq = params["bq"].reshape(1, D).astype(f32)
    bk = params["bk"].reshape(1, D).astype(f32)
    bv = params["bv"].reshape(1, D).astype(f32)
    bo = params["bo"].reshape(1, D).astype(f32)
    gamma = params["ln_g"].reshape(1, D).astype(f32)
    beta = params["ln_b"].reshape(1, D).astype(f32)

    vmem_lim = _vmem_limit_bytes()

    # ---- Kernel A: LayerNorm + QKV projections over tall (row_tile, D) tiles.
    x1 = srb1.reshape(M, D)
    x2 = srb2.reshape(M, D)
    row_tile = min(M, 512)     # TODO(synk): sweep per generation / per D
                               # (v7x's 64 MiB VMEM wants 256-512 for large D).
    pad_rows = (-M) % row_tile
    if pad_rows:               # padded tail rows are computed then sliced off
        x1 = jnp.pad(x1, ((0, pad_rows), (0, 0)))
        x2 = jnp.pad(x2, ((0, pad_rows), (0, 0)))
    Mp = M + pad_rows

    x_spec = pl.BlockSpec((row_tile, D), lambda i: (i, 0))
    w_spec = _const_spec((D, D), lambda i: (0, 0))      # single-buffered weights
    r_spec = _const_spec((1, D), lambda i: (0, 0))      # biases / LN params

    q, k, v = pl.pallas_call(
        functools.partial(_norm_qkv_kernel, eps=eps,
                          q_scale=1.0 / math.sqrt(hd), mxu_dtype=mxu_dtype),
        out_shape=tuple(jax.ShapeDtypeStruct((Mp, D), mxu_dtype) for _ in range(3)),
        grid_spec=pltpu.PrefetchScalarGridSpec(
            num_scalar_prefetch=0,
            grid=(Mp // row_tile,),
            in_specs=[x_spec, x_spec, r_spec, r_spec,
                      w_spec, r_spec, w_spec, r_spec, w_spec, r_spec],
            out_specs=[x_spec, x_spec, x_spec],
        ),
        compiler_params=pltpu.CompilerParams(
            dimension_semantics=("parallel",),
            vmem_limit_bytes=vmem_lim),
    )(x1, x2, gamma, beta, wq_t, bq, wk_t, bk, wv_t, bv)

    if pad_rows:
        q, k, v = q[:M], k[:M], v[:M]

    # (M, D) -> (B, S, D) is a free row-major reshape: no head-major transpose
    # round trip through HBM; heads are sliced inside Kernel B instead.
    q3 = q.reshape(B, S, D)
    k3 = k.reshape(B, S, D)
    v3 = v.reshape(B, S, D)

    # ---- Kernel B: all heads per batch element, fused attention + out-proj.
    bsd_spec = pl.BlockSpec((1, S, D), lambda b: (b, 0, 0))

    out = pl.pallas_call(
        functools.partial(_attn_outproj_kernel, num_heads=H, mxu_dtype=mxu_dtype),
        out_shape=jax.ShapeDtypeStruct((B, S, D), srb1.dtype),
        grid_spec=pltpu.PrefetchScalarGridSpec(
            num_scalar_prefetch=0,
            grid=(B,),
            in_specs=[bsd_spec, bsd_spec, bsd_spec,
                      _const_spec((D, D), lambda b: (0, 0)),   # Wo^T, 1-buffered
                      _const_spec((1, D), lambda b: (0, 0)),   # bo
                      bsd_spec],                               # residual srb1
            out_specs=bsd_spec,
        ),
        compiler_params=pltpu.CompilerParams(
            dimension_semantics=("parallel",),
            vmem_limit_bytes=vmem_lim),
    )(q3, k3, v3, wo_t, bo, srb1)
    return out


# ----------------------------------------------------------------------------
# Pure-JAX reference + parameter init
# ----------------------------------------------------------------------------
def _reference(srb1, srb2, params, *, num_heads, eps=1e-5):
    """Pure-JAX f32 reference replicating the PyTorch forward (eval mode)."""
    B, S, D = srb1.shape
    hd = D // num_heads

    def layer_norm(x):
        mu = jnp.mean(x, axis=-1, keepdims=True)
        var = jnp.mean((x - mu) ** 2, axis=-1, keepdims=True)
        return (x - mu) / jnp.sqrt(var + eps) * params["ln_g"] + params["ln_b"]

    def linear(x, w, b):
        return x @ w.T + b

    def split(x):
        return x.reshape(B, S, num_heads, hd).transpose(0, 2, 1, 3)

    n1, n2 = layer_norm(srb1), layer_norm(srb2)
    Q = split(linear(n1, params["wq"], params["bq"]))
    K = split(linear(n2, params["wk"], params["bk"]))
    V = split(linear(n2, params["wv"], params["bv"]))

    scores = jnp.einsum("bhqd,bhkd->bhqk", Q, K) / math.sqrt(hd)
    attn = jax.nn.softmax(scores, axis=-1)
    ctx = jnp.einsum("bhqk,bhkd->bhqd", attn, V)
    ctx = ctx.transpose(0, 2, 1, 3).reshape(B, S, D)
    mha_out = linear(ctx, params["wo"], params["bo"])
    return srb1 + mha_out      # dropout == identity at eval


def _init_params(key, model_dim):
    """Deterministic nn.Linear-style init + default LayerNorm affine params."""
    bound = 1.0 / math.sqrt(model_dim)
    names = ["wq", "bq", "wk", "bk", "wv", "bv", "wo", "bo"]
    keys = jax.random.split(key, len(names))
    params = {}
    for name, k in zip(names, keys):
        shape = (model_dim, model_dim) if name.startswith("w") else (model_dim,)
        params[name] = jax.random.uniform(k, shape, jnp.float32, -bound, bound)
    params["ln_g"] = jnp.ones((model_dim,), jnp.float32)
    params["ln_b"] = jnp.zeros((model_dim,), jnp.float32)
    return params


if __name__ == "__main__":
    # Small shapes consistent with the module.
    B, S, D, H = 2, 8, 32, 4   # batch, seq, model_dimension, number_of_heads

    root = jax.random.PRNGKey(0)
    k1, k2, kp = jax.random.split(root, 3)
    srb1 = jax.random.normal(k1, (B, S, D), jnp.float32)
    srb2 = jax.random.normal(k2, (B, S, D), jnp.float32)
    params = _init_params(kp, D)

    out = sublayer_logic_forward(srb1, srb2, params, num_heads=H)
    out = jax.block_until_ready(out)

    ref = _reference(srb1, srb2, params, num_heads=H)
    # MXU operands are bf16 (f32 accumulation) and the softmax denominator uses
    # the approx EUP reciprocal, so compare with bf16-level tolerances.
    np.testing.assert_allclose(np.asarray(out, np.float32), np.asarray(ref),
                               rtol=3e-2, atol=3e-2)

    print("KERNEL_OK")
</pallas_src>

<mosaic_0001>
module attributes {stable_mosaic.version = 11 : i64} {
  func.func @_norm_qkv_kernel(%arg0: i32, %arg1: memref<16x32xf32, #tpu.memory_space<vmem>>, %arg2: memref<16x32xf32, #tpu.memory_space<vmem>>, %arg3: memref<1x32xf32, #tpu.memory_space<vmem>>, %arg4: memref<1x32xf32, #tpu.memory_space<vmem>>, %arg5: memref<32x32xbf16, #tpu.memory_space<vmem>>, %arg6: memref<1x32xf32, #tpu.memory_space<vmem>>, %arg7: memref<32x32xbf16, #tpu.memory_space<vmem>>, %arg8: memref<1x32xf32, #tpu.memory_space<vmem>>, %arg9: memref<32x32xbf16, #tpu.memory_space<vmem>>, %arg10: memref<1x32xf32, #tpu.memory_space<vmem>>, %arg11: memref<16x32xbf16, #tpu.memory_space<vmem>>, %arg12: memref<16x32xbf16, #tpu.memory_space<vmem>>, %arg13: memref<16x32xbf16, #tpu.memory_space<vmem>>) attributes {dimension_semantics = [#tpu.dimension_semantics<parallel>], iteration_bounds = array<i64: 1>, scalar_prefetch = 0 : i64, scratch_operands = 0 : i64, tpu.core_type = #tpu.core_type<tc>, window_params = [{transform_indices = @transform_0, window_bounds = array<i64: 16, 32>}, {transform_indices = @transform_1, window_bounds = array<i64: 16, 32>}, {pipeline_mode = #tpu.pipeline_mode<synchronous>, transform_indices = @transform_2, window_bounds = array<i64: 1, 32>}, {pipeline_mode = #tpu.pipeline_mode<synchronous>, transform_indices = @transform_3, window_bounds = array<i64: 1, 32>}, {pipeline_mode = #tpu.pipeline_mode<synchronous>, transform_indices = @transform_4, window_bounds = array<i64: 32, 32>}, {pipeline_mode = #tpu.pipeline_mode<synchronous>, transform_indices = @transform_5, window_bounds = array<i64: 1, 32>}, {pipeline_mode = #tpu.pipeline_mode<synchronous>, transform_indices = @transform_6, window_bounds = array<i64: 32, 32>}, {pipeline_mode = #tpu.pipeline_mode<synchronous>, transform_indices = @transform_7, window_bounds = array<i64: 1, 32>}, {pipeline_mode = #tpu.pipeline_mode<synchronous>, transform_indices = @transform_8, window_bounds = array<i64: 32, 32>}, {pipeline_mode = #tpu.pipeline_mode<synchronous>, transform_indices = @transform_9, window_bounds = array<i64: 1, 32>}, {transform_indices = @transform_10, window_bounds = array<i64: 16, 32>}, {transform_indices = @transform_11, window_bounds = array<i64: 16, 32>}, {transform_indices = @transform_12, window_bounds = array<i64: 16, 32>}]} {
    %c0 = arith.constant 0 : index
    %c0_0 = arith.constant 0 : index
    %0 = vector.load %arg3[%c0, %c0_0] : memref<1x32xf32, #tpu.memory_space<vmem>>, vector<1x32xf32>
    %c0_1 = arith.constant 0 : index
    %c0_2 = arith.constant 0 : index
    %1 = vector.load %arg4[%c0_1, %c0_2] : memref<1x32xf32, #tpu.memory_space<vmem>>, vector<1x32xf32>
    %c0_3 = arith.constant 0 : index
    %c0_4 = arith.constant 0 : index
    %2 = vector.load %arg1[%c0_3, %c0_4] : memref<16x32xf32, #tpu.memory_space<vmem>>, vector<16x32xf32>
    %cst = arith.constant dense<0.000000e+00> : vector<16xf32>
    %3 = vector.multi_reduction <add>, %2, %cst [1] : vector<16x32xf32> to vector<16xf32>
    %4 = vector.shape_cast %3 : vector<16xf32> to vector<16x1xf32>
    %cst_5 = arith.constant 3.200000e+01 : f32
    %5 = vector.broadcast %cst_5 : f32 to vector<16x1xf32>
    %6 = arith.divf %4, %5 : vector<16x1xf32>
    %7 = vector.broadcast %6 : vector<16x1xf32> to vector<16x32xf32>
    %8 = arith.subf %2, %7 : vector<16x32xf32>
    %9 = arith.mulf %8, %8 : vector<16x32xf32>
    %cst_6 = arith.constant dense<0.000000e+00> : vector<16xf32>
    %10 = vector.multi_reduction <add>, %9, %cst_6 [1] : vector<16x32xf32> to vector<16xf32>
    %11 = vector.shape_cast %10 : vector<16xf32> to vector<16x1xf32>
    %cst_7 = arith.constant 3.200000e+01 : f32
    %12 = vector.broadcast %cst_7 : f32 to vector<16x1xf32>
    %13 = arith.divf %11, %12 : vector<16x1xf32>
    %cst_8 = arith.constant 9.99999974E-6 : f32
    %14 = vector.broadcast %cst_8 : f32 to vector<16x1xf32>
    %15 = arith.addf %13, %14 : vector<16x1xf32>
    %16 = math.rsqrt %15 : vector<16x1xf32>
    %17 = vector.broadcast %16 : vector<16x1xf32> to vector<16x32xf32>
    %18 = arith.mulf %8, %17 : vector<16x32xf32>
    %19 = vector.broadcast %0 : vector<1x32xf32> to vector<16x32xf32>
    %20 = arith.mulf %18, %19 : vector<16x32xf32>
    %21 = vector.broadcast %1 : vector<1x32xf32> to vector<16x32xf32>
    %22 = arith.addf %20, %21 : vector<16x32xf32>
    %23 = arith.truncf %22 : vector<16x32xf32> to vector<16x32xbf16>
    %c0_9 = arith.constant 0 : index
    %c0_10 = arith.constant 0 : index
    %24 = vector.load %arg2[%c0_9, %c0_10] : memref<16x32xf32, #tpu.memory_space<vmem>>, vector<16x32xf32>
    %cst_11 = arith.constant dense<0.000000e+00> : vector<16xf32>
    %25 = vector.multi_reduction <add>, %24, %cst_11 [1] : vector<16x32xf32> to vector<16xf32>
    %26 = vector.shape_cast %25 : vector<16xf32> to vector<16x1xf32>
    %cst_12 = arith.constant 3.200000e+01 : f32
    %27 = vector.broadcast %cst_12 : f32 to vector<16x1xf32>
    %28 = arith.divf %26, %27 : vector<16x1xf32>
    %29 = vector.broadcast %28 : vector<16x1xf32> to vector<16x32xf32>
    %30 = arith.subf %24, %29 : vector<16x32xf32>
    %31 = arith.mulf %30, %30 : vector<16x32xf32>
    %cst_13 = arith.constant dense<0.000000e+00> : vector<16xf32>
    %32 = vector.multi_reduction <add>, %31, %cst_13 [1] : vector<16x32xf32> to vector<16xf32>
    %33 = vector.shape_cast %32 : vector<16xf32> to vector<16x1xf32>
    %cst_14 = arith.constant 3.200000e+01 : f32
    %34 = vector.broadcast %cst_14 : f32 to vector<16x1xf32>
    %35 = arith.divf %33, %34 : vector<16x1xf32>
    %cst_15 = arith.constant 9.99999974E-6 : f32
    %36 = vector.broadcast %cst_15 : f32 to vector<16x1xf32>
    %37 = arith.addf %35, %36 : vector<16x1xf32>
    %38 = math.rsqrt %37 : vector<16x1xf32>
    %39 = vector.broadcast %38 : vector<16x1xf32> to vector<16x32xf32>
    %40 = arith.mulf %30, %39 : vector<16x32xf32>
    %41 = vector.broadcast %0 : vector<1x32xf32> to vector<16x32xf32>
    %42 = arith.mulf %40, %41 : vector<16x32xf32>
    %43 = vector.broadcast %1 : vector<1x32xf32> to vector<16x32xf32>
    %44 = arith.addf %42, %43 : vector<16x32xf32>
    %45 = arith.truncf %44 : vector<16x32xf32> to vector<16x32xbf16>
    %c0_16 = arith.constant 0 : index
    %c0_17 = arith.constant 0 : index
    %46 = vector.load %arg5[%c0_16, %c0_17] : memref<32x32xbf16, #tpu.memory_space<vmem>>, vector<32x32xbf16>
    %cst_18 = arith.constant dense<0.000000e+00> : vector<16x32xf32>
    %47 = tpu.matmul %23, %46, %cst_18 {dimension_numbers = #tpu.dot_dimension_numbers<[1], [0], [0], [1], [0, 0, 1, 1], [], []>} : vector<16x32xbf16>, vector<32x32xbf16>, vector<16x32xf32> -> vector<16x32xf32>
    %c0_19 = arith.constant 0 : index
    %c0_20 = arith.constant 0 : index
    %48 = vector.load %arg6[%c0_19, %c0_20] : memref<1x32xf32, #tpu.memory_space<vmem>>, vector<1x32xf32>
    %49 = vector.broadcast %48 : vector<1x32xf32> to vector<16x32xf32>
    %50 = arith.addf %47, %49 : vector<16x32xf32>
    %c0_21 = arith.constant 0 : index
    %c0_22 = arith.constant 0 : index
    %51 = vector.load %arg7[%c0_21, %c0_22] : memref<32x32xbf16, #tpu.memory_space<vmem>>, vector<32x32xbf16>
    %cst_23 = arith.constant dense<0.000000e+00> : vector<16x32xf32>
    %52 = tpu.matmul %45, %51, %cst_23 {dimension_numbers = #tpu.dot_dimension_numbers<[1], [0], [0], [1], [0, 0, 1, 1], [], []>} : vector<16x32xbf16>, vector<32x32xbf16>, vector<16x32xf32> -> vector<16x32xf32>
    %c0_24 = arith.constant 0 : index
    %c0_25 = arith.constant 0 : index
    %53 = vector.load %arg8[%c0_24, %c0_25] : memref<1x32xf32, #tpu.memory_space<vmem>>, vector<1x32xf32>
    %54 = vector.broadcast %53 : vector<1x32xf32> to vector<16x32xf32>
    %55 = arith.addf %52, %54 : vector<16x32xf32>
    %c0_26 = arith.constant 0 : index
    %c0_27 = arith.constant 0 : index
    %56 = vector.load %arg9[%c0_26, %c0_27] : memref<32x32xbf16, #tpu.memory_space<vmem>>, vector<32x32xbf16>
    %cst_28 = arith.constant dense<0.000000e+00> : vector<16x32xf32>
    %57 = tpu.matmul %45, %56, %cst_28 {dimension_numbers = #tpu.dot_dimension_numbers<[1], [0], [0], [1], [0, 0, 1, 1], [], []>} : vector<16x32xbf16>, vector<32x32xbf16>, vector<16x32xf32> -> vector<16x32xf32>
    %c0_29 = arith.constant 0 : index
    %c0_30 = arith.constant 0 : index
    %58 = vector.load %arg10[%c0_29, %c0_30] : memref<1x32xf32, #tpu.memory_space<vmem>>, vector<1x32xf32>
    %59 = vector.broadcast %58 : vector<1x32xf32> to vector<16x32xf32>
    %60 = arith.addf %57, %59 : vector<16x32xf32>
    %cst_31 = arith.constant 0.353553385 : f32
    %61 = vector.broadcast %cst_31 : f32 to vector<16x32xf32>
    %62 = arith.mulf %50, %61 : vector<16x32xf32>
    %63 = arith.truncf %62 : vector<16x32xf32> to vector<16x32xbf16>
    %c0_32 = arith.constant 0 : index
    %c0_33 = arith.constant 0 : index
    %64 = vector.load %arg11[%c0_32, %c0_33] : memref<16x32xbf16, #tpu.memory_space<vmem>>, vector<16x32xbf16>
    tpu.vector_store %arg11[%c0_32, %c0_33], %63 {strides = array<i32>} : memref<16x32xbf16, #tpu.memory_space<vmem>>, vector<16x32xbf16>,
    %65 = arith.truncf %55 : vector<16x32xf32> to vector<16x32xbf16>
    %c0_34 = arith.constant 0 : index
    %c0_35 = arith.constant 0 : index
    %66 = vector.load %arg12[%c0_34, %c0_35] : memref<16x32xbf16, #tpu.memory_space<vmem>>, vector<16x32xbf16>
    tpu.vector_store %arg12[%c0_34, %c0_35], %65 {strides = array<i32>} : memref<16x32xbf16, #tpu.memory_space<vmem>>, vector<16x32xbf16>,
    %67 = arith.truncf %60 : vector<16x32xf32> to vector<16x32xbf16>
    %c0_36 = arith.constant 0 : index
    %c0_37 = arith.constant 0 : index
    %68 = vector.load %arg13[%c0_36, %c0_37] : memref<16x32xbf16, #tpu.memory_space<vmem>>, vector<16x32xbf16>
    tpu.vector_store %arg13[%c0_36, %c0_37], %67 {strides = array<i32>} : memref<16x32xbf16, #tpu.memory_space<vmem>>, vector<16x32xbf16>,
    return
  }
  func.func @transform_0(%arg0: i32) -> (i32, i32) {
    %c0_i32 = arith.constant 0 : i32
    %c0_i32_0 = arith.constant 0 : i32
    return %arg0, %c0_i32 : i32, i32
  }
  func.func @transform_1(%arg0: i32) -> (i32, i32) {
    %c0_i32 = arith.constant 0 : i32
    %c0_i32_0 = arith.constant 0 : i32
    return %arg0, %c0_i32 : i32, i32
  }
  func.func @transform_2(%arg0: i32) -> (i32, i32) {
    %c0_i32 = arith.constant 0 : i32
    %c0_i32_0 = arith.constant 0 : i32
    %c0_i32_1 = arith.constant 0 : i32
    return %c0_i32, %c0_i32_0 : i32, i32
  }
  func.func @transform_3(%arg0: i32) -> (i32, i32) {
    %c0_i32 = arith.constant 0 : i32
    %c0_i32_0 = arith.constant 0 : i32
    %c0_i32_1 = arith.constant 0 : i32
    return %c0_i32, %c0_i32_0 : i32, i32
  }
  func.func @transform_4(%arg0: i32) -> (i32, i32) {
    %c0_i32 = arith.constant 0 : i32
    %c0_i32_0 = arith.constant 0 : i32
    %c0_i32_1 = arith.constant 0 : i32
    return %c0_i32, %c0_i32_0 : i32, i32
  }
  func.func @transform_5(%arg0: i32) -> (i32, i32) {
    %c0_i32 = arith.constant 0 : i32
    %c0_i32_0 = arith.constant 0 : i32
    %c0_i32_1 = arith.constant 0 : i32
    return %c0_i32, %c0_i32_0 : i32, i32
  }
  func.func @transform_6(%arg0: i32) -> (i32, i32) {
    %c0_i32 = arith.constant 0 : i32
    %c0_i32_0 = arith.constant 0 : i32
    %c0_i32_1 = arith.constant 0 : i32
    return %c0_i32, %c0_i32_0 : i32, i32
  }
  func.func @transform_7(%arg0: i32) -> (i32, i32) {
    %c0_i32 = arith.constant 0 : i32
    %c0_i32_0 = arith.constant 0 : i32
    %c0_i32_1 = arith.constant 0 : i32
    return %c0_i32, %c0_i32_0 : i32, i32
  }
  func.func @transform_8(%arg0: i32) -> (i32, i32) {
    %c0_i32 = arith.constant 0 : i32
    %c0_i32_0 = arith.constant 0 : i32
    %c0_i32_1 = arith.constant 0 : i32
    return %c0_i32, %c0_i32_0 : i32, i32
  }
  func.func @transform_9(%arg0: i32) -> (i32, i32) {
    %c0_i32 = arith.constant 0 : i32
    %c0_i32_0 = arith.constant 0 : i32
    %c0_i32_1 = arith.constant 0 : i32
    return %c0_i32, %c0_i32_0 : i32, i32
  }
  func.func @transform_10(%arg0: i32) -> (i32, i32) {
    %c0_i32 = arith.constant 0 : i32
    %c0_i32_0 = arith.constant 0 : i32
    return %arg0, %c0_i32 : i32, i32
  }
  func.func @transform_11(%arg0: i32) -> (i32, i32) {
    %c0_i32 = arith.constant 0 : i32
    %c0_i32_0 = arith.constant 0 : i32
    return %arg0, %c0_i32 : i32, i32
  }
  func.func @transform_12(%arg0: i32) -> (i32, i32) {
    %c0_i32 = arith.constant 0 : i32
    %c0_i32_0 = arith.constant 0 : i32
    return %arg0, %c0_i32 : i32, i32
  }
}

</mosaic_0001>

<llo_original>
// kernel: tpu_custom_call.1
$region0: #{tpu_custom_call.1}
  #allocation0 [shape = 'u32[]', space=smem, size = 0x4, offset = 0x4, fixed_abs, tag = 'smem constant byte address 0x4 - core index']
  #allocation1 [shape = 'u32[144,128]{1,0:T(1,128)}', space=vmem, size = 0x12000, scoped, tag = 'internal scratch']
  %s0 = inlined_call_operand.hbm [shape: f32[16,32], index: 0, kind: input, shape index: {}]
  %s1 = inlined_call_operand.hbm [shape: f32[16,32], index: 1, kind: input, shape index: {}]
  %s2 = inlined_call_operand.vmem [shape: f32[1,32], index: 2, kind: input, shape index: {}]
  %s3 = inlined_call_operand.vmem [shape: f32[1,32], index: 3, kind: input, shape index: {}]
  %s4 = inlined_call_operand.hbm [shape: bf16[32,32], index: 4, kind: input, shape index: {}]
  %s5 = inlined_call_operand.vmem [shape: f32[1,32], index: 5, kind: input, shape index: {}]
  %s6 = inlined_call_operand.hbm [shape: bf16[32,32], index: 6, kind: input, shape index: {}]
  %s7 = inlined_call_operand.vmem [shape: f32[1,32], index: 7, kind: input, shape index: {}]
  %s8 = inlined_call_operand.hbm [shape: bf16[32,32], index: 8, kind: input, shape index: {}]
  %s9 = inlined_call_operand.vmem [shape: f32[1,32], index: 9, kind: input, shape index: {}]
  %s10 = inlined_call_operand.hbm [shape: bf16[16,32], index: 10, kind: output, shape index: {0}]
  %s11 = inlined_call_operand.hbm [shape: bf16[16,32], index: 11, kind: output, shape index: {1}]
  %s12 = inlined_call_operand.hbm [shape: bf16[16,32], index: 12, kind: output, shape index: {2}]
  %13 = xla_tuple %s10, %s11, %s12
  %s14 = sld [smem:[#allocation0]]
  $region86: #{tpu_custom_call.1} parent=0
    _
  %s16 = ssub.s32 1, %s14
  %s17 = scalar_select 0, %s16, %s14
  $region1: #{tpu_custom_call.1} parent=0
    #allocation2 [shape = 'u8[8192]{0}', space=vmem, size = 0x2000, scoped, tag = 'input window, operand 0, single buffered']
    #allocation3 [shape = 's32[1]{0}', space=sflag, size = 0x4, scoped, tag = 'scoped memory for tpu_custom_call.1']
    #allocation4 [shape = 's32[1]{0}', space=sflag, size = 0x4, scoped, tag = 'scoped memory for tpu_custom_call.1']
    #allocation5 [shape = 'u8[8192]{0}', space=vmem, size = 0x2000, scoped, tag = 'input window, operand 1, single buffered']
    #allocation6 [shape = 's32[1]{0}', space=sflag, size = 0x4, scoped, tag = 'scoped memory for tpu_custom_call.1']
    #allocation7 [shape = 'u8[8192]{0}', space=vmem, size = 0x2000, scoped, tag = 'input window, operand 4, single buffered']
    #allocation8 [shape = 'u8[8192]{0}', space=vmem, size = 0x2000, scoped, tag = 'input window, operand 6, single buffered']
    #allocation9 [shape = 's32[1]{0}', space=sflag, size = 0x4, scoped, tag = 'scoped memory for tpu_custom_call.1']
    #allocation10 [shape = 'u8[8192]{0}', space=vmem, size = 0x2000, scoped, tag = 'input window, operand 8, single buffered']
    #allocation11 [shape = 'u8[4096]{0}', space=vmem, size = 0x1000, scoped, tag = 'output window, operand 0, single buffered']
    #allocation12 [shape = 'u8[4096]{0}', space=vmem, size = 0x1000, scoped, tag = 'output window, operand 1, single buffered']
    #allocation13 [shape = 's32[1]{0}', space=sflag, size = 0x4, scoped, tag = 'scoped memory for tpu_custom_call.1']
    #allocation14 [shape = 'u8[4096]{0}', space=vmem, size = 0x1000, scoped, tag = 'output window, operand 2, single buffered']
    %18 = vsyncpa [#allocation3], 0
    %19 = vsyncpa [#allocation6], 0
    %20 = vsyncpa [#allocation9], 0
    %21 = vsyncpa [#allocation4], 0
    %22 = vsyncpa [#allocation13], 0
    // Predicated region
    $region2: #{tpu_custom_call.1} parent=1 // pred_check
      _
    $region3: #{tpu_custom_call.1} parent=1 // pred_check_branch
      %24 = sbr.rel (0) target = $region5
    $region4: #{tpu_custom_call.1} parent=1 // pred_region
      %s26 = ssub.s32 256, 256
      %27 = vsyncadd [#allocation3], %s26
      %s28 = sshll.u32 [#allocation2], 4
      %s29 = int_to_ptr.vmem [resolvable:$true] %s28
      %34 = dma.hbm_to_vmem [thread:$0]  %s0, 256, %s29, [#allocation3], 128, 128, 8
    $region5: #{tpu_custom_call.1} parent=1 // pred_fallthru
      _
    // Predicated region
    $region6: #{tpu_custom_call.1} parent=1 // pred_check
      _
    $region7: #{tpu_custom_call.1} parent=1 // pred_check_branch
      %36 = sbr.rel (0) target = $region9
    $region8: #{tpu_custom_call.1} parent=1 // pred_region
      %s38 = ssub.s32 256, 256
      %39 = vsyncadd [#allocation6], %s38
      %s40 = sshll.u32 [#allocation5], 4
      %s41 = int_to_ptr.vmem [resolvable:$true] %s40
      %46 = dma.hbm_to_vmem [thread:$0]  %s1, 256, %s41, [#allocation6], 128, 128, 8
    $region9: #{tpu_custom_call.1} parent=1 // pred_fallthru
      _
    // Predicated region
    $region10: #{tpu_custom_call.1} parent=1 // pred_check
      _
    $region11: #{tpu_custom_call.1} parent=1 // pred_check_branch
      %48 = sbr.rel (0) target = $region13
    $region12: #{tpu_custom_call.1} parent=1 // pred_region
      _
    $region13: #{tpu_custom_call.1} parent=1 // pred_fallthru
      _
    // Predicated region
    $region14: #{tpu_custom_call.1} parent=1 // pred_check
      _
    $region15: #{tpu_custom_call.1} parent=1 // pred_check_branch
      %50 = sbr.rel (0) target = $region17
    $region16: #{tpu_custom_call.1} parent=1 // pred_region
      _
    $region17: #{tpu_custom_call.1} parent=1 // pred_fallthru
      _
    // Predicated region
    $region18: #{tpu_custom_call.1} parent=1 // pred_check
      _
    $region19: #{tpu_custom_call.1} parent=1 // pred_check_branch
      %52 = sbr.rel (0) target = $region21
    $region20: #{tpu_custom_call.1} parent=1 // pred_region
      %s54 = ssub.s32 256, 256
      %55 = vsyncadd [#allocation6], %s54
      %s56 = sshll.u32 [#allocation7], 4
      %s57 = int_to_ptr.vmem [resolvable:$true] %s56
      %62 = dma.hbm_to_vmem [thread:$0]  %s4, 256, %s57, [#allocation6], 64, 64, 4
    $region21: #{tpu_custom_call.1} parent=1 // pred_fallthru
      _
    // Predicated region
    $region22: #{tpu_custom_call.1} parent=1 // pred_check
      _
    $region23: #{tpu_custom_call.1} parent=1 // pred_check_branch
      %64 = sbr.rel (0) target = $region25
    $region24: #{tpu_custom_call.1} parent=1 // pred_region
      _
    $region25: #{tpu_custom_call.1} parent=1 // pred_fallthru
      _
    // Predicated region
    $region26: #{tpu_custom_call.1} parent=1 // pred_check
      _
    $region27: #{tpu_custom_call.1} parent=1 // pred_check_branch
      %66 = sbr.rel (0) target = $region29
    $region28: #{tpu_custom_call.1} parent=1 // pred_region
      %s68 = ssub.s32 256, 256
      %69 = vsyncadd [#allocation9], %s68
      %s70 = sshll.u32 [#allocation8], 4
      %s71 = int_to_ptr.vmem [resolvable:$true] %s70
      %76 = dma.hbm_to_vmem [thread:$0]  %s6, 256, %s71, [#allocation9], 64, 64, 4
    $region29: #{tpu_custom_call.1} parent=1 // pred_fallthru
      _
    // Predicated region
    $region30: #{tpu_custom_call.1} parent=1 // pred_check
      _
    $region31: #{tpu_custom_call.1} parent=1 // pred_check_branch
      %78 = sbr.rel (0) target = $region33
    $region32: #{tpu_custom_call.1} parent=1 // pred_region
      _
    $region33: #{tpu_custom_call.1} parent=1 // pred_fallthru
      _
    // Predicated region
    $region34: #{tpu_custom_call.1} parent=1 // pred_check
      _
    $region35: #{tpu_custom_call.1} parent=1 // pred_check_branch
      %80 = sbr.rel (0) target = $region37
    $region36: #{tpu_custom_call.1} parent=1 // pred_region
      %s82 = ssub.s32 256, 256
      %83 = vsyncadd [#allocation9], %s82
      %s84 = sshll.u32 [#allocation10], 4
      %s85 = int_to_ptr.vmem [resolvable:$true] %s84
      %90 = dma.hbm_to_vmem [thread:$0]  %s8, 256, %s85, [#allocation9], 64, 64, 4
    $region37: #{tpu_custom_call.1} parent=1 // pred_fallthru
      _
    // Predicated region
    $region38: #{tpu_custom_call.1} parent=1 // pred_check
      _
    $region39: #{tpu_custom_call.1} parent=1 // pred_check_branch
      %92 = sbr.rel (0) target = $region41
    $region40: #{tpu_custom_call.1} parent=1 // pred_region
      _
    $region41: #{tpu_custom_call.1} parent=1 // pred_fallthru
      _
    // Predicated region
    $region42: #{tpu_custom_call.1} parent=1 // pred_check
      _
    $region43: #{tpu_custom_call.1} parent=1 // pred_check_branch
      %94 = sbr.rel (0) target = $region45
    $region44: #{tpu_custom_call.1} parent=1 // pred_region
      %95 = dma.done [#allocation3], 256
    $region45: #{tpu_custom_call.1} parent=1 // pred_fallthru
      _
    // Predicated region
    $region46: #{tpu_custom_call.1} parent=1 // pred_check
      _
    $region47: #{tpu_custom_call.1} parent=1 // pred_check_branch
      %97 = sbr.rel (0) target = $region49
    $region48: #{tpu_custom_call.1} parent=1 // pred_region
      %98 = dma.done [#allocation6], 256
    $region49: #{tpu_custom_call.1} parent=1 // pred_fallthru
      _
    // Predicated region
    $region50: #{tpu_custom_call.1} parent=1 // pred_check
      _
    $region51: #{tpu_custom_call.1} parent=1 // pred_check_branch
      %100 = sbr.rel (0) target = $region53
    $region52: #{tpu_custom_call.1} parent=1 // pred_region
      %101 = dma.done [#allocation6], 256
    $region53: #{tpu_custom_call.1} parent=1 // pred_fallthru
      _
    // Predicated region
    $region54: #{tpu_custom_call.1} parent=1 // pred_check
      _
    $region55: #{tpu_custom_call.1} parent=1 // pred_check_branch
      %103 = sbr.rel (0) target = $region57
    $region56: #{tpu_custom_call.1} parent=1 // pred_region
      %104 = dma.done [#allocation9], 256
    $region57: #{tpu_custom_call.1} parent=1 // pred_fallthru
      _
    // Predicated region
    $region58: #{tpu_custom_call.1} parent=1 // pred_check
      _
    $region59: #{tpu_custom_call.1} parent=1 // pred_check_branch
      %106 = sbr.rel (0) target = $region61
    $region60: #{tpu_custom_call.1} parent=1 // pred_region
      %107 = dma.done [#allocation9], 256
    $region61: #{tpu_custom_call.1} parent=1 // pred_fallthru
      _
    %v109 = vld [vmem:[%s2] sm:$0x1]
    %v110 = vld [vmem:[%s3] sm:$0x1]
    %v111 = vld [vmem:[#allocation2] sm:$0xff]
    %v112 = vld [vmem:[#allocation2 + $0x8] sm:$0xff]
    %vm113 = vcmask 261120
    %v114 = vsel %vm113, %v111, 0.0
    %115 = vadd.xlane.f32.xlu0 %v114
    %v116 = vpop.xlane.xlu0 %115
    %v117 = vsel %vm113, %v112, 0.0
    %118 = vadd.xlane.f32.xlu0 %v117
    %v119 = vpop.xlane.xlu0 %118
    %v120 = vrcp.pop 32.0
    %v121 = vmul.f32 %v116, %v120
    %v122 = vmul.f32 %v119, %v120
    %v123 = vsub.f32 %v111, %v121
    %v124 = vsub.f32 %v112, %v122
    %v125 = vmul.f32 %v123, %v123
    %v126 = vmul.f32 %v124, %v124
    %v127 = vsel %vm113, %v125, 0.0
    %128 = vadd.xlane.f32.xlu0 %v127
    %v129 = vpop.xlane.xlu0 %128
    %v130 = vsel %vm113, %v126, 0.0
    %131 = vadd.xlane.f32.xlu0 %v130
    %v132 = vpop.xlane.xlu0 %131
    %v133 = vmul.f32 %v129, %v120
    %v134 = vmul.f32 %v132, %v120
    %v135 = vadd.f32 %v133, 1e-05
    %v136 = vadd.f32 %v134, 1e-05
    %v137 = vrsqrt.pop %v135
    %v138 = vrsqrt.pop %v136
    %v139 = vmul.f32 %v123, %v137
    %v140 = vmul.f32 %v124, %v138
    %v142 = vlaneseq
    %v143 = vshrl.u32 %v142, 7
    %v144 = vsub.s32 0, %v143
    %v145 = vrot.slane %v109, %v144
    %v147 = vmul.f32 %v139, %v145
    %v148 = vmul.f32 %v140, %v145
    %v150 = vlaneseq
    %v151 = vshrl.u32 %v150, 7
    %v152 = vsub.s32 0, %v151
    %v153 = vrot.slane %v110, %v152
    %v155 = vadd.f32 %v147, %v153
    %v156 = vadd.f32 %v148, %v153
    %v157 = vpack.c.bf16 %v156, %v155
    %v158 = vld [vmem:[#allocation5] sm:$0xff]
    %v159 = vld [vmem:[#allocation5 + $0x8] sm:$0xff]
    %v160 = vsel %vm113, %v158, 0.0
    %161 = vadd.xlane.f32.xlu0 %v160
    %v162 = vpop.xlane.xlu0 %161
    %v163 = vsel %vm113, %v159, 0.0
    %164 = vadd.xlane.f32.xlu0 %v163
    %v165 = vpop.xlane.xlu0 %164
    %v166 = vmul.f32 %v162, %v120
    %v167 = vmul.f32 %v165, %v120
    %v168 = vsub.f32 %v158, %v166
    %v169 = vsub.f32 %v159, %v167
    %v170 = vmul.f32 %v168, %v168
    %v171 = vmul.f32 %v169, %v169
    %v172 = vsel %vm113, %v170, 0.0
    %173 = vadd.xlane.f32.xlu0 %v172
    %v174 = vpop.xlane.xlu0 %173
    %v175 = vsel %vm113, %v171, 0.0
    %176 = vadd.xlane.f32.xlu0 %v175
    %v177 = vpop.xlane.xlu0 %176
    %v178 = vmul.f32 %v174, %v120
    %v179 = vmul.f32 %v177, %v120
    %v180 = vadd.f32 %v178, 1e-05
    %v181 = vadd.f32 %v179, 1e-05
    %v182 = vrsqrt.pop %v180
    %v183 = vrsqrt.pop %v181
    %v184 = vmul.f32 %v168, %v182
    %v185 = vmul.f32 %v169, %v183
    %v186 = vmul.f32 %v184, %v145
    %v187 = vmul.f32 %v185, %v145
    %v188 = vadd.f32 %v186, %v153
    %v189 = vadd.f32 %v187, %v153
    %v190 = vpack.c.bf16 %v189, %v188
    %v191 = vld [vmem:[#allocation7] sm:$0xf]
    %v192 = vld [vmem:[#allocation7 + $0x4] sm:$0xf]
    %v193 = vld [vmem:[#allocation7 + $0x8] sm:$0xf]
    %v194 = vld [vmem:[#allocation7 + $0xc] sm:$0xf]
    %v195 = vld [vmem:[%s5] sm:$0x1]
    %v197 = vlaneseq
    %v198 = vshrl.u32 %v197, 7
    %v199 = vsub.s32 0, %v198
    %v200 = vrot.slane %v195, %v199
    %v206 = vunpack.c.l.b16 %v191
    %v207 = vunpack.c.l.b16 %v192
    %v208 = vunpack.c.l.b16 %v193
    %v209 = vunpack.c.l.b16 %v194
    %v210 = vpack.c.b16 %v207, %v206
    %v211 = vpack.c.b16 %v209, %v208
    %v215 = vsel %vm113, %v157, 0
    %217 = vmatprep.subr.bf16.mxu0 0
    %218 = vmatpush1.bf16.msra.mxu0 0
    %219 = vmatprep.subr.bf16.mxu0 0
    %220 = vmatpush1.bf16.msra.mxu0 0
    %221 = vmatprep.subr.bf16.mxu0 0
    %222 = vmatpush1.bf16.msra.mxu0 0
    %223 = vmatprep.subr.bf16.mxu0 0
    %224 = vmatpush1.bf16.msra.mxu0 0
    %225 = vmatprep.subr.bf16.mxu0 0
    %226 = vmatpush1.bf16.msra.mxu0 0
    %227 = vmatprep.subr.bf16.mxu0 0
    %228 = vmatpush1.bf16.msra.mxu0 0
    %229 = vmatprep.subr.bf16.mxu0 0
    %230 = vmatpush1.bf16.msra.mxu0 %v211
    %231 = vmatprep.subr.bf16.mxu0 0
    %232 = vmatpush1.bf16.msra.mxu0 %v210
    %233 = vmatprep.subr.bf16.mxu0 0
    %234 = vmatpush2.bf16.msra.mxu0 0
    %235 = vmatprep.subr.bf16.mxu0 0
    %236 = vmatpush2.bf16.msra.mxu0 0
    %237 = vmatprep.subr.bf16.mxu0 0
    %238 = vmatpush2.bf16.msra.mxu0 0
    %239 = vmatprep.subr.bf16.mxu0 0
    %240 = vmatpush2.bf16.msra.mxu0 0
    %241 = vmatprep.subr.bf16.mxu0 0
    %242 = vmatpush2.bf16.msra.mxu0 0
    %243 = vmatprep.subr.bf16.mxu0 0
    %244 = vmatpush2.bf16.msra.mxu0 0
    %245 = vmatprep.subr.bf16.mxu0 0
    %246 = vmatpush2.bf16.msra.mxu0 0
    %247 = vmatprep.subr.bf16.mxu0 0
    %248 = vmatpush2.bf16.msra.mxu0 0
    %249 = vmatprep.mubr.bf16.mxu0 0
    %250 = vmatmul.mubr.bf16.gmra.mxu0 %v215
    %v251 = vpop.f32.mrf.mxu0
    %v252 = vadd.f32 %v200, %v251
    %v253 = vpop.f32.mrf.mxu0
    %v254 = vpop.f32.mrf.mxu0
    %v255 = vadd.f32 %v200, %v254
    %v256 = vpop.f32.mrf.mxu0
    %257 = vdwg.mxu0
    %v258 = vld [vmem:[#allocation8] sm:$0xf]
    %v259 = vld [vmem:[#allocation8 + $0x4] sm:$0xf]
    %v260 = vld [vmem:[#allocation8 + $0x8] sm:$0xf]
    %v261 = vld [vmem:[#allocation8 + $0xc] sm:$0xf]
    %v262 = vld [vmem:[%s7] sm:$0x1]
    %v264 = vlaneseq
    %v265 = vshrl.u32 %v264, 7
    %v266 = vsub.s32 0, %v265
    %v267 = vrot.slane %v262, %v266
    %v273 = vunpack.c.l.b16 %v258
    %v274 = vunpack.c.l.b16 %v259
    %v275 = vunpack.c.l.b16 %v260
    %v276 = vunpack.c.l.b16 %v261
    %v277 = vpack.c.b16 %v274, %v273
    %v278 = vpack.c.b16 %v276, %v275
    %v282 = vsel %vm113, %v190, 0
    %284 = vmatprep.subr.bf16.mxu0 0
    %285 = vmatpush1.bf16.msra.mxu0 0
    %286 = vmatprep.subr.bf16.mxu0 0
    %287 = vmatpush1.bf16.msra.mxu0 0
    %288 = vmatprep.subr.bf16.mxu0 0
    %289 = vmatpush1.bf16.msra.mxu0 0
    %290 = vmatprep.subr.bf16.mxu0 0
    %291 = vmatpush1.bf16.msra.mxu0 0
    %292 = vmatprep.subr.bf16.mxu0 0
    %293 = vmatpush1.bf16.msra.mxu0 0
    %294 = vmatprep.subr.bf16.mxu0 0
    %295 = vmatpush1.bf16.msra.mxu0 0
    %296 = vmatprep.subr.bf16.mxu0 0
    %297 = vmatpush1.bf16.msra.mxu0 %v278
    %298 = vmatprep.subr.bf16.mxu0 0
    %299 = vmatpush1.bf16.msra.mxu0 %v277
    %300 = vmatprep.subr.bf16.mxu0 0
    %301 = vmatpush2.bf16.msra.mxu0 0
    %302 = vmatprep.subr.bf16.mxu0 0
    %303 = vmatpush2.bf16.msra.mxu0 0
    %304 = vmatprep.subr.bf16.mxu0 0
    %305 = vmatpush2.bf16.msra.mxu0 0
    %306 = vmatprep.subr.bf16.mxu0 0
    %307 = vmatpush2.bf16.msra.mxu0 0
    %308 = vmatprep.subr.bf16.mxu0 0
    %309 = vmatpush2.bf16.msra.mxu0 0
    %310 = vmatprep.subr.bf16.mxu0 0
    %311 = vmatpush2.bf16.msra.mxu0 0
    %312 = vmatprep.subr.bf16.mxu0 0
    %313 = vmatpush2.bf16.msra.mxu0 0
    %314 = vmatprep.subr.bf16.mxu0 0
    %315 = vmatpush2.bf16.msra.mxu0 0
    %316 = vmatprep.mubr.bf16.mxu0 0
    %317 = vmatmul.mubr.bf16.gmra.mxu0 %v282
    %v318 = vpop.f32.mrf.mxu0
    %v319 = vadd.f32 %v267, %v318
    %v320 = vpop.f32.mrf.mxu0
    %v321 = vpop.f32.mrf.mxu0
    %v322 = vadd.f32 %v267, %v321
    %v323 = vpop.f32.mrf.mxu0
    %324 = vdwg.mxu0
    %v325 = vld [vmem:[#allocation10] sm:$0xf]
    %v326 = vld [vmem:[#allocation10 + $0x4] sm:$0xf]
    %v327 = vld [vmem:[#allocation10 + $0x8] sm:$0xf]
    %v328 = vld [vmem:[#allocation10 + $0xc] sm:$0xf]
    %v329 = vld [vmem:[%s9] sm:$0x1]
    %v331 = vlaneseq
    %v332 = vshrl.u32 %v331, 7
    %v333 = vsub.s32 0, %v332
    %v334 = vrot.slane %v329, %v333
    %v340 = vunpack.c.l.b16 %v325
    %v341 = vunpack.c.l.b16 %v326
    %v342 = vunpack.c.l.b16 %v327
    %v343 = vunpack.c.l.b16 %v328
    %v344 = vpack.c.b16 %v341, %v340
    %v345 = vpack.c.b16 %v343, %v342
    %348 = vmatprep.subr.bf16.mxu0 0
    %349 = vmatpush1.bf16.msra.mxu0 0
    %350 = vmatprep.subr.bf16.mxu0 0
    %351 = vmatpush1.bf16.msra.mxu0 0
    %352 = vmatprep.subr.bf16.mxu0 0
    %353 = vmatpush1.bf16.msra.mxu0 0
    %354 = vmatprep.subr.bf16.mxu0 0
    %355 = vmatpush1.bf16.msra.mxu0 0
    %356 = vmatprep.subr.bf16.mxu0 0
    %357 = vmatpush1.bf16.msra.mxu0 0
    %358 = vmatprep.subr.bf16.mxu0 0
    %359 = vmatpush1.bf16.msra.mxu0 0
    %360 = vmatprep.subr.bf16.mxu0 0
    %361 = vmatpush1.bf16.msra.mxu0 %v345
    %362 = vmatprep.subr.bf16.mxu0 0
    %363 = vmatpush1.bf16.msra.mxu0 %v344
    %364 = vmatprep.subr.bf16.mxu0 0
    %365 = vmatpush2.bf16.msra.mxu0 0
    %366 = vmatprep.subr.bf16.mxu0 0
    %367 = vmatpush2.bf16.msra.mxu0 0
    %368 = vmatprep.subr.bf16.mxu0 0
    %369 = vmatpush2.bf16.msra.mxu0 0
    %370 = vmatprep.subr.bf16.mxu0 0
    %371 = vmatpush2.bf16.msra.mxu0 0
    %372 = vmatprep.subr.bf16.mxu0 0
    %373 = vmatpush2.bf16.msra.mxu0 0
    %374 = vmatprep.subr.bf16.mxu0 0
    %375 = vmatpush2.bf16.msra.mxu0 0
    %376 = vmatprep.subr.bf16.mxu0 0
    %377 = vmatpush2.bf16.msra.mxu0 0
    %378 = vmatprep.subr.bf16.mxu0 0
    %379 = vmatpush2.bf16.msra.mxu0 0
    %380 = vmatprep.mubr.bf16.mxu0 0
    %381 = vmatmul.mubr.bf16.gmra.mxu0 %v282
    %v382 = vpop.f32.mrf.mxu0
    %v383 = vadd.f32 %v334, %v382
    %v384 = vpop.f32.mrf.mxu0
    %v385 = vpop.f32.mrf.mxu0
    %v386 = vadd.f32 %v334, %v385
    %v387 = vpop.f32.mrf.mxu0
    %388 = vdwg.mxu0
    %v389 = vmul.f32 %v252, 0.35355338
    %v390 = vmul.f32 %v255, 0.35355338
    %v391 = vpack.c.bf16 %v390, %v389
    %v393 = vunpack.c.l.b16 %v391
    %v394 = vunpack.c.h.b16 %v391
    %v395 = vpack.c.b16 %v393, %v393
    %v396 = vpack.c.b16 %v394, %v394
    %vm399 = vcmask 257024
    %400 = vst.msk [vmem:[#allocation11] sm:$0xf] %vm399, %v395
    %401 = vst.msk [vmem:[#allocation11 + $0x4] sm:$0xf] %vm399, %v396
    %v402 = vpack.c.bf16 %v322, %v319
    %v404 = vunpack.c.l.b16 %v402
    %v405 = vunpack.c.h.b16 %v402
    %v406 = vpack.c.b16 %v404, %v404
    %v407 = vpack.c.b16 %v405, %v405
    %410 = vst.msk [vmem:[#allocation12] sm:$0xf] %vm399, %v406
    %411 = vst.msk [vmem:[#allocation12 + $0x4] sm:$0xf] %vm399, %v407
    %v412 = vpack.c.bf16 %v386, %v383
    %v414 = vunpack.c.l.b16 %v412
    %v415 = vunpack.c.h.b16 %v412
    %v416 = vpack.c.b16 %v414, %v414
    %v417 = vpack.c.b16 %v415, %v415
    %420 = vst.msk [vmem:[#allocation14] sm:$0xf] %vm399, %v416
    %421 = vst.msk [vmem:[#allocation14 + $0x4] sm:$0xf] %vm399, %v417
    // Predicated region
    $region62: #{tpu_custom_call.1} parent=1 // pred_check
      _
    $region63: #{tpu_custom_call.1} parent=1 // pred_check_branch
      %423 = sbr.rel (0) target = $region65
    $region64: #{tpu_custom_call.1} parent=1 // pred_region
      %s425 = ssub.s32 128, 128
      %426 = vsyncadd [#allocation4], %s425
      %s427 = sshll.u32 [#allocation11], 4
      %s428 = int_to_ptr.vmem [resolvable:$true] %s427
      %433 = dma.vmem_to_hbm [thread:$0]  %s428, 128, %s10, [#allocation4], 64, 64, 4
    $region65: #{tpu_custom_call.1} parent=1 // pred_fallthru
      _
    // Predicated region
    $region66: #{tpu_custom_call.1} parent=1 // pred_check
      _
    $region67: #{tpu_custom_call.1} parent=1 // pred_check_branch
      %435 = sbr.rel (0) target = $region69
    $region68: #{tpu_custom_call.1} parent=1 // pred_region
      %s437 = ssub.s32 128, 128
      %438 = vsyncadd [#allocation13], %s437
      %s439 = sshll.u32 [#allocation12], 4
      %s440 = int_to_ptr.vmem [resolvable:$true] %s439
      %445 = dma.vmem_to_hbm [thread:$0]  %s440, 128, %s11, [#allocation13], 64, 64, 4
    $region69: #{tpu_custom_call.1} parent=1 // pred_fallthru
      _
    // Predicated region
    $region70: #{tpu_custom_call.1} parent=1 // pred_check
      _
    $region71: #{tpu_custom_call.1} parent=1 // pred_check_branch
      %447 = sbr.rel (0) target = $region73
    $region72: #{tpu_custom_call.1} parent=1 // pred_region
      %s449 = ssub.s32 128, 128
      %450 = vsyncadd [#allocation13], %s449
      %s451 = sshll.u32 [#allocation14], 4
      %s452 = int_to_ptr.vmem [resolvable:$true] %s451
      %457 = dma.vmem_to_hbm [thread:$0]  %s452, 128, %s12, [#allocation13], 64, 64, 4
    $region73: #{tpu_custom_call.1} parent=1 // pred_fallthru
      _
    // Predicated region
    $region74: #{tpu_custom_call.1} parent=1 // pred_check
      _
    $region75: #{tpu_custom_call.1} parent=1 // pred_check_branch
      %459 = sbr.rel (0) target = $region77
    $region76: #{tpu_custom_call.1} parent=1 // pred_region
      %460 = dma.done [#allocation4], 128
    $region77: #{tpu_custom_call.1} parent=1 // pred_fallthru
      _
    // Predicated region
    $region78: #{tpu_custom_call.1} parent=1 // pred_check
      _
    $region79: #{tpu_custom_call.1} parent=1 // pred_check_branch
      %462 = sbr.rel (0) target = $region81
    $region80: #{tpu_custom_call.1} parent=1 // pred_region
      %463 = dma.done [#allocation13], 128
    $region81: #{tpu_custom_call.1} parent=1 // pred_fallthru
      _
    // Predicated region
    $region82: #{tpu_custom_call.1} parent=1 // pred_check
      _
    $region83: #{tpu_custom_call.1} parent=1 // pred_check_branch
      %465 = sbr.rel (0) target = $region85
    $region84: #{tpu_custom_call.1} parent=1 // pred_region
      %466 = dma.done [#allocation13], 128
    $region85: #{tpu_custom_call.1} parent=1 // pred_fallthru
      _
    %467 = vsyncpa [#allocation3], 1
    %468 = vsyncpa [#allocation6], 1
    %469 = vsyncpa [#allocation9], 1
    %470 = vsyncpa [#allocation4], 1
    %471 = vsyncpa [#allocation13], 1

</llo_original>
